<compile_context>
chip_gen: v7x
topology: tpu7x:2x2x1
jax: 0.10.0
libtpu: 0.0.40
codegen_flags: <defaults>
</compile_context>

<pallas_src>
import functools

import jax
import jax.numpy as jnp
from jax.experimental import pallas as pl
from jax.experimental.pallas import tpu as pltpu


# --------------------------------------------------------------------------- #
# Kernel
# --------------------------------------------------------------------------- #
def _apply_activation(h, activation):
    if activation == "relu":
        return jnp.maximum(h, 0.0)
    if activation == "tanh":
        return jnp.tanh(h)
    if activation == "sigmoid":
        return jax.nn.sigmoid(h)
    if activation is None:
        return h
    raise ValueError(f"unsupported activation: {activation}")


def _fused_mlp_kernel(*refs, n_layers, activation):
    """Fused MLP in transposed ("features x batch") layout.

    refs = (x_ref, w0, b0, w1, b1, ..., w_{L-1}, b_{L-1}, o_ref)
      x_ref : (Din,   tile_b)   -- batch on the lane axis (last dim, mult. of 128)
      w_l   : (Dout_l, Din_l)   -- torch Linear weight layout
      b_l   : (Dout_l, 1)       -- bias broadcasts along the lane/batch axis
      o_ref : (Dout,  tile_b)

    Intermediate activations are plain in-kernel values; only the final result
    is stored.  The layer loop is statically unrolled (layer count is static).
    """
    x_ref, o_ref = refs[0], refs[-1]
    wb = refs[1:-1]
    assert len(wb) == 2 * n_layers

    h = x_ref[...].astype(jnp.float32)                        # (Din, tile_b)
    for layer in range(n_layers):
        w_ref = wb[2 * layer]
        b_ref = wb[2 * layer + 1]
        # Cast activations to the weight dtype for the MXU; accumulate in f32.
        h = jnp.dot(w_ref[...], h.astype(w_ref.dtype),
                    preferred_element_type=jnp.float32)        # (Dout_l, tile_b)
        h = h + b_ref[...].astype(jnp.float32)                 # lane-broadcast bias
        if layer < n_layers - 1:                               # no act on last layer
            h = _apply_activation(h, activation)
    o_ref[...] = h.astype(o_ref.dtype)


def _flatten_params(params):
    flat = []
    for w, b in params:
        flat.append(w)
        flat.append(b)
    return flat


# --------------------------------------------------------------------------- #
# Wrappers
# --------------------------------------------------------------------------- #
def mlp_forward_fused(x, params, activation_function="relu"):
    """Tiny-input path (single predict() call): no grid, no pipelining.

    x: (B, Din), params: list of (w:(Dout_i, Din_i), b:(Dout_i, 1)).
    """
    B, _ = x.shape
    n_layers = len(params)
    Dout = params[-1][0].shape[0]
    flat = _flatten_params(params)

    kernel = functools.partial(_fused_mlp_kernel,
                               n_layers=n_layers,
                               activation=activation_function)
    vmem = pl.BlockSpec(memory_space=pltpu.MemorySpace.VMEM)
    out_t = pl.pallas_call(
        kernel,
        out_shape=jax.ShapeDtypeStruct((Dout, B), x.dtype),
        in_specs=[vmem] * (1 + len(flat)),
        out_specs=vmem,
    )(x.T, *flat)                                              # (Dout, B)
    return out_t.T


def mlp_forward_batched(x, params, activation_function="relu", tile_b=512):
    """Batched rollout path: lane-dense tiles over the batch, resident weights.

    x: (B, Din).  B is zero-padded to a multiple of tile_b; tile_b must be a
    multiple of 128 (lane width).  Batch axis is 'parallel' (v7x megacore).
    """
    B, Din = x.shape
    n_layers = len(params)
    Dout = params[-1][0].shape[0]
    assert tile_b % 128 == 0, "tile_b must be a multiple of the 128-wide lane axis"

    pad = (-B) % tile_b
    xt = x.T                                                   # (Din, B): batch -> lanes
    if pad:
        xt = jnp.pad(xt, ((0, 0), (0, pad)))
    Bp = B + pad

    flat = _flatten_params(params)
    in_specs = [pl.BlockSpec((Din, tile_b), lambda i: (0, i))]
    for w, b in params:
        # Full-extent blocks + constant index_map -> DMA'd once, VMEM-resident.
        in_specs.append(pl.BlockSpec(w.shape, lambda i: (0, 0)))
        in_specs.append(pl.BlockSpec(b.shape, lambda i: (0, 0)))

    kernel = functools.partial(_fused_mlp_kernel,
                               n_layers=n_layers,
                               activation=activation_function)

    flops = 2 * Bp * sum(w.shape[0] * w.shape[1] for w, _ in params)
    transcendentals = 0
    if activation_function in ("tanh", "sigmoid"):
        transcendentals = Bp * sum(w.shape[0] for w, _ in params[:-1])
    bytes_accessed = (
        xt.size * xt.dtype.itemsize
        + sum(w.size * w.dtype.itemsize + b.size * b.dtype.itemsize
              for w, b in params)
        + Dout * Bp * x.dtype.itemsize
    )

    out_t = pl.pallas_call(
        kernel,
        out_shape=jax.ShapeDtypeStruct((Dout, Bp), x.dtype),
        grid=(Bp // tile_b,),
        in_specs=in_specs,
        out_specs=pl.BlockSpec((Dout, tile_b), lambda i: (0, i)),
        compiler_params=pltpu.CompilerParams(
            dimension_semantics=("parallel",)),
        cost_estimate=pl.CostEstimate(flops=flops,
                                      transcendentals=transcendentals,
                                      bytes_accessed=bytes_accessed),
    )(xt, *flat)                                               # (Dout, Bp)
    return out_t[:, :B].T


def mlp_forward_population(x, stacked_params, activation_function="relu", tile_b=128):
    """Evolutionary-RL path: evaluate a whole population in ONE pallas_call.

    x: (P, B, Din); stacked_params: list of (W:(P, Dout_i, Din_i), b:(P, Dout_i, 1)).
    Grid = (population, batch tiles), both axes 'parallel'.  Amortizes per-call
    launch / DMA-priming overhead across all P genomes.
    """
    P, B, Din = x.shape
    n_layers = len(stacked_params)
    Dout = stacked_params[-1][0].shape[1]
    assert tile_b % 128 == 0

    pad = (-B) % tile_b
    xt = jnp.transpose(x, (0, 2, 1))                           # (P, Din, B)
    if pad:
        xt = jnp.pad(xt, ((0, 0), (0, 0), (0, pad)))
    Bp = B + pad

    flat = _flatten_params(stacked_params)
    in_specs = [pl.BlockSpec((None, Din, tile_b), lambda p, i: (p, 0, i))]
    for w, b in stacked_params:
        in_specs.append(pl.BlockSpec((None,) + w.shape[1:], lambda p, i: (p, 0, 0)))
        in_specs.append(pl.BlockSpec((None,) + b.shape[1:], lambda p, i: (p, 0, 0)))

    kernel = functools.partial(_fused_mlp_kernel,
                               n_layers=n_layers,
                               activation=activation_function)

    flops = 2 * P * Bp * sum(w.shape[1] * w.shape[2] for w, _ in stacked_params)
    transcendentals = 0
    if activation_function in ("tanh", "sigmoid"):
        transcendentals = P * Bp * sum(w.shape[1] for w, _ in stacked_params[:-1])
    bytes_accessed = (
        xt.size * xt.dtype.itemsize
        + sum(w.size * w.dtype.itemsize + b.size * b.dtype.itemsize
              for w, b in stacked_params)
        + P * Dout * Bp * x.dtype.itemsize
    )

    out_t = pl.pallas_call(
        kernel,
        out_shape=jax.ShapeDtypeStruct((P, Dout, Bp), x.dtype),
        grid=(P, Bp // tile_b),
        in_specs=in_specs,
        out_specs=pl.BlockSpec((None, Dout, tile_b), lambda p, i: (p, 0, i)),
        compiler_params=pltpu.CompilerParams(
            dimension_semantics=("parallel", "parallel")),
        cost_estimate=pl.CostEstimate(flops=flops,
                                      transcendentals=transcendentals,
                                      bytes_accessed=bytes_accessed),
    )(xt, *flat)                                               # (P, Dout, Bp)
    return jnp.transpose(out_t[:, :, :B], (0, 2, 1))


def _choose_tile(B, batch_tile):
    # Lane axis is 128 wide; keep >= 2 grid steps so the 'parallel' batch axis
    # splits across both v7x TensorCores (no-op on single-TC v5e/v6e).
    half = max(128, (B // 2) // 128 * 128)
    return max(128, min(batch_tile, half))


def neural_network_forward(x, params, activation_function="relu", batch_tile=512):
    """Equivalent of NeuralNetwork.forward.

    Small batches (predict()) take the no-grid fused path; larger batches take
    the tiled/parallel path with zero-padding of ragged batch sizes (no
    unpipelined whole-array-in-VMEM fallback).
    """
    B = x.shape[0]
    if B < 256:
        return mlp_forward_fused(x, params, activation_function)
    tile = _choose_tile(B, batch_tile)
    return mlp_forward_batched(x, params, activation_function, tile_b=tile)


# --------------------------------------------------------------------------- #
# Params / reference
# --------------------------------------------------------------------------- #
def init_mlp_params(key, input_dim, hidden_layers, output_dim, dtype=jnp.float32):
    """nn.Linear-style init, weights kept in torch layout (Dout, Din), bias (Dout, 1)."""
    dims = [input_dim] + list(hidden_layers) + [output_dim]
    params = []
    for i in range(len(dims) - 1):
        fan_in, fan_out = dims[i], dims[i + 1]
        key, kw, kb = jax.random.split(key, 3)
        bound = 1.0 / (fan_in ** 0.5)
        w = jax.random.uniform(kw, (fan_out, fan_in), dtype, -bound, bound)
        b = jax.random.uniform(kb, (fan_out, 1), dtype, -bound, bound)
        params.append((w, b))
    return params


def stack_population_params(param_list):
    """list(P) of per-genome params -> list(L) of ((P,Dout,Din), (P,Dout,1))."""
    n_layers = len(param_list[0])
    return [(jnp.stack([p[l][0] for p in param_list]),
             jnp.stack([p[l][1] for p in param_list]))
            for l in range(n_layers)]


def _reference_forward(x, params, activation_function):
    h = x
    for idx, (w, b) in enumerate(params):
        h = h @ w.T + b.T
        if idx < len(params) - 1:
            h = _apply_activation(h, activation_function)
    return h


# TODO(synk): mutate()/crossover()/predict() are host-side parameter manipulation
# and device bookkeeping, not part of the forward pass; they are not kernelized.

if __name__ == "__main__":
    input_dim, hidden_layers, output_dim = 16, [32, 32], 8
    activation = "relu"

    key = jax.random.PRNGKey(0)
    key, kx = jax.random.split(key)
    x = jax.random.normal(kx, (2, input_dim), dtype=jnp.float32)
    key, kp = jax.random.split(key)
    params = init_mlp_params(kp, input_dim, hidden_layers, output_dim)

    # --- tiny predict() path: whole MLP fused, no grid ---------------------------
    out = jax.block_until_ready(neural_network_forward(x, params, activation))
    ref = _reference_forward(x, params, activation)
    assert out.shape == (2, output_dim)
    assert jnp.allclose(out, ref, atol=1e-5, rtol=1e-5)

    # --- batched rollout path: lane-dense tiles, >=2 'parallel' grid steps -------
    key, kb = jax.random.split(key)
    xb = jax.random.normal(kb, (512, input_dim), dtype=jnp.float32)
    out_b = jax.block_until_ready(neural_network_forward(xb, params, activation))
    ref_b = _reference_forward(xb, params, activation)
    assert out_b.shape == (512, output_dim)
    assert jnp.allclose(out_b, ref_b, atol=1e-4, rtol=1e-4)

    # --- ragged batch: exercises zero-padding instead of the VMEM fallback -------
    key, kr = jax.random.split(key)
    xr = jax.random.normal(kr, (300, input_dim), dtype=jnp.float32)
    out_r = jax.block_until_ready(neural_network_forward(xr, params, activation))
    ref_r = _reference_forward(xr, params, activation)
    assert out_r.shape == (300, output_dim)
    assert jnp.allclose(out_r, ref_r, atol=1e-4, rtol=1e-4)

    # --- population path: P genomes in one pallas_call ---------------------------
    P, Bpop = 4, 256
    pop = [init_mlp_params(k, input_dim, hidden_layers, output_dim)
           for k in jax.random.split(jax.random.PRNGKey(1), P)]
    stacked = stack_population_params(pop)
    key, kpop = jax.random.split(key)
    xp = jax.random.normal(kpop, (P, Bpop, input_dim), dtype=jnp.float32)
    out_p = jax.block_until_ready(
        mlp_forward_population(xp, stacked, activation, tile_b=128))
    assert out_p.shape == (P, Bpop, output_dim)
    for p in range(P):
        ref_p = _reference_forward(xp[p], pop[p], activation)
        assert jnp.allclose(out_p[p], ref_p, atol=1e-4, rtol=1e-4)

    print("KERNEL_OK")
</pallas_src>

<mosaic_0001>
module attributes {stable_mosaic.version = 11 : i64} {
  func.func @_fused_mlp_kernel(%arg0: memref<16x2xf32, #tpu.memory_space<vmem>>, %arg1: memref<32x16xf32, #tpu.memory_space<vmem>>, %arg2: memref<32x1xf32, #tpu.memory_space<vmem>>, %arg3: memref<32x32xf32, #tpu.memory_space<vmem>>, %arg4: memref<32x1xf32, #tpu.memory_space<vmem>>, %arg5: memref<8x32xf32, #tpu.memory_space<vmem>>, %arg6: memref<8x1xf32, #tpu.memory_space<vmem>>, %arg7: memref<8x2xf32, #tpu.memory_space<vmem>>) attributes {dimension_semantics = [], scalar_prefetch = 0 : i64, scratch_operands = 0 : i64, tpu.core_type = #tpu.core_type<tc>} {
    %c0 = arith.constant 0 : index
    %c0_0 = arith.constant 0 : index
    %0 = vector.load %arg0[%c0, %c0_0] : memref<16x2xf32, #tpu.memory_space<vmem>>, vector<16x2xf32>
    %c0_1 = arith.constant 0 : index
    %c0_2 = arith.constant 0 : index
    %1 = vector.load %arg1[%c0_1, %c0_2] : memref<32x16xf32, #tpu.memory_space<vmem>>, vector<32x16xf32>
    %cst = arith.constant dense<0.000000e+00> : vector<32x2xf32>
    %2 = tpu.matmul %1, %0, %cst {dimension_numbers = #tpu.dot_dimension_numbers<[1], [0], [0], [1], [0, 0, 1, 1], [], []>} : vector<32x16xf32>, vector<16x2xf32>, vector<32x2xf32> -> vector<32x2xf32>
    %c0_3 = arith.constant 0 : index
    %c0_4 = arith.constant 0 : index
    %3 = vector.load %arg2[%c0_3, %c0_4] : memref<32x1xf32, #tpu.memory_space<vmem>>, vector<32x1xf32>
    %4 = vector.broadcast %3 : vector<32x1xf32> to vector<32x2xf32>
    %5 = arith.addf %2, %4 : vector<32x2xf32>
    %cst_5 = arith.constant 0.000000e+00 : f32
    %6 = vector.broadcast %cst_5 : f32 to vector<32x2xf32>
    %7 = arith.maximumf %5, %6 : vector<32x2xf32>
    %c0_6 = arith.constant 0 : index
    %c0_7 = arith.constant 0 : index
    %8 = vector.load %arg3[%c0_6, %c0_7] : memref<32x32xf32, #tpu.memory_space<vmem>>, vector<32x32xf32>
    %cst_8 = arith.constant dense<0.000000e+00> : vector<32x2xf32>
    %9 = tpu.matmul %8, %7, %cst_8 {dimension_numbers = #tpu.dot_dimension_numbers<[1], [0], [0], [1], [0, 0, 1, 1], [], []>} : vector<32x32xf32>, vector<32x2xf32>, vector<32x2xf32> -> vector<32x2xf32>
    %c0_9 = arith.constant 0 : index
    %c0_10 = arith.constant 0 : index
    %10 = vector.load %arg4[%c0_9, %c0_10] : memref<32x1xf32, #tpu.memory_space<vmem>>, vector<32x1xf32>
    %11 = vector.broadcast %10 : vector<32x1xf32> to vector<32x2xf32>
    %12 = arith.addf %9, %11 : vector<32x2xf32>
    %cst_11 = arith.constant 0.000000e+00 : f32
    %13 = vector.broadcast %cst_11 : f32 to vector<32x2xf32>
    %14 = arith.maximumf %12, %13 : vector<32x2xf32>
    %c0_12 = arith.constant 0 : index
    %c0_13 = arith.constant 0 : index
    %15 = vector.load %arg5[%c0_12, %c0_13] : memref<8x32xf32, #tpu.memory_space<vmem>>, vector<8x32xf32>
    %cst_14 = arith.constant dense<0.000000e+00> : vector<8x2xf32>
    %16 = tpu.matmul %15, %14, %cst_14 {dimension_numbers = #tpu.dot_dimension_numbers<[1], [0], [0], [1], [0, 0, 1, 1], [], []>} : vector<8x32xf32>, vector<32x2xf32>, vector<8x2xf32> -> vector<8x2xf32>
    %c0_15 = arith.constant 0 : index
    %c0_16 = arith.constant 0 : index
    %17 = vector.load %arg6[%c0_15, %c0_16] : memref<8x1xf32, #tpu.memory_space<vmem>>, vector<8x1xf32>
    %18 = vector.broadcast %17 : vector<8x1xf32> to vector<8x2xf32>
    %19 = arith.addf %16, %18 : vector<8x2xf32>
    %c0_17 = arith.constant 0 : index
    %c0_18 = arith.constant 0 : index
    %20 = vector.load %arg7[%c0_17, %c0_18] : memref<8x2xf32, #tpu.memory_space<vmem>>, vector<8x2xf32>
    tpu.vector_store %arg7[%c0_17, %c0_18], %19 {strides = array<i32>} : memref<8x2xf32, #tpu.memory_space<vmem>>, vector<8x2xf32>,
    return
  }
}

</mosaic_0001>

<llo_original>
// kernel: tpu_custom_call.1
$region0: #{tpu_custom_call.1}
  #allocation0 [shape = 'u32[]', space=smem, size = 0x4, offset = 0x4, fixed_abs, tag = 'smem constant byte address 0x4 - core index']
  #allocation1 [shape = 'u32[144,128]{1,0:T(1,128)}', space=vmem, size = 0x12000, scoped, tag = 'internal scratch']
  %s0 = inlined_call_operand.vmem [shape: f32[16,2], index: 0, kind: input, shape index: {}]
  %s1 = inlined_call_operand.vmem [shape: f32[32,16], index: 1, kind: input, shape index: {}]
  %s2 = inlined_call_operand.vmem [shape: f32[32,1], index: 2, kind: input, shape index: {}]
  %s3 = inlined_call_operand.vmem [shape: f32[32,32], index: 3, kind: input, shape index: {}]
  %s4 = inlined_call_operand.vmem [shape: f32[32,1], index: 4, kind: input, shape index: {}]
  %s5 = inlined_call_operand.vmem [shape: f32[8,32], index: 5, kind: input, shape index: {}]
  %s6 = inlined_call_operand.vmem [shape: f32[8,1], index: 6, kind: input, shape index: {}]
  %s7 = inlined_call_operand.vmem [shape: f32[8,2], index: 7, kind: output, shape index: {}]
  %s8 = sld [smem:[#allocation0]]
  $region38: #{tpu_custom_call.1} parent=0
    _
  %s10 = ssub.s32 1, %s8
  %s11 = scalar_select 0, %s10, %s8
  // Predicated region
  $region2: #{tpu_custom_call.1} parent=0 // pred_check
    _
  $region3: #{tpu_custom_call.1} parent=0 // pred_check_branch
    %13 = sbr.rel (0) target = $region5
  $region4: #{tpu_custom_call.1} parent=0 // pred_region
    _
  $region5: #{tpu_custom_call.1} parent=0 // pred_fallthru
    _
  // Predicated region
  $region6: #{tpu_custom_call.1} parent=0 // pred_check
    _
  $region7: #{tpu_custom_call.1} parent=0 // pred_check_branch
    %15 = sbr.rel (0) target = $region9
  $region8: #{tpu_custom_call.1} parent=0 // pred_region
    _
  $region9: #{tpu_custom_call.1} parent=0 // pred_fallthru
    _
  // Predicated region
  $region10: #{tpu_custom_call.1} parent=0 // pred_check
    _
  $region11: #{tpu_custom_call.1} parent=0 // pred_check_branch
    %17 = sbr.rel (0) target = $region13
  $region12: #{tpu_custom_call.1} parent=0 // pred_region
    _
  $region13: #{tpu_custom_call.1} parent=0 // pred_fallthru
    _
  // Predicated region
  $region14: #{tpu_custom_call.1} parent=0 // pred_check
    _
  $region15: #{tpu_custom_call.1} parent=0 // pred_check_branch
    %19 = sbr.rel (0) target = $region17
  $region16: #{tpu_custom_call.1} parent=0 // pred_region
    _
  $region17: #{tpu_custom_call.1} parent=0 // pred_fallthru
    _
  // Predicated region
  $region18: #{tpu_custom_call.1} parent=0 // pred_check
    _
  $region19: #{tpu_custom_call.1} parent=0 // pred_check_branch
    %21 = sbr.rel (0) target = $region21
  $region20: #{tpu_custom_call.1} parent=0 // pred_region
    _
  $region21: #{tpu_custom_call.1} parent=0 // pred_fallthru
    _
  // Predicated region
  $region22: #{tpu_custom_call.1} parent=0 // pred_check
    _
  $region23: #{tpu_custom_call.1} parent=0 // pred_check_branch
    %23 = sbr.rel (0) target = $region25
  $region24: #{tpu_custom_call.1} parent=0 // pred_region
    _
  $region25: #{tpu_custom_call.1} parent=0 // pred_fallthru
    _
  // Predicated region
  $region26: #{tpu_custom_call.1} parent=0 // pred_check
    _
  $region27: #{tpu_custom_call.1} parent=0 // pred_check_branch
    %25 = sbr.rel (0) target = $region29
  $region28: #{tpu_custom_call.1} parent=0 // pred_region
    _
  $region29: #{tpu_custom_call.1} parent=0 // pred_fallthru
    _
  %v26 = vld [vmem:[%s0] sm:$0xff]
  %v27 = vld [vmem:[%s0 + $0x8] sm:$0xff]
  %v28 = vld [vmem:[%s1] sm:$0xff]
  %v29 = vld [vmem:[%s1 + $0x8] sm:$0xff]
  %v30 = vld [vmem:[%s1 + $0x10] sm:$0xff]
  %v31 = vld [vmem:[%s1 + $0x18] sm:$0xff]
  %v32 = vld [vmem:[%s2] sm:$0xff]
  %v33 = vld [vmem:[%s2 + $0x8] sm:$0xff]
  %v34 = vld [vmem:[%s2 + $0x10] sm:$0xff]
  %v35 = vld [vmem:[%s2 + $0x18] sm:$0xff]
  %37 = vset.pattern.permute.xlu0 0
  %38 = vperm.xlu0 %37, %v32
  %v39 = vpop.permute.xlu0 %38
  %42 = vset.pattern.permute.xlu0 0
  %43 = vperm.xlu0 %42, %v33
  %v44 = vpop.permute.xlu0 %43
  %47 = vset.pattern.permute.xlu0 0
  %48 = vperm.xlu0 %47, %v34
  %v49 = vpop.permute.xlu0 %48
  %52 = vset.pattern.permute.xlu0 0
  %53 = vperm.xlu0 %52, %v35
  %v54 = vpop.permute.xlu0 %53
  %vm56 = vcmask 130048
  %v58 = vsel %vm56, %v28, 0
  %v61 = vsel %vm56, %v29, 0
  %v64 = vsel %vm56, %v30, 0
  %v67 = vsel %vm56, %v31, 0
  %69 = vmatprep.subr.mxu0 0.0
  %70 = vmatpush1.msra.mxu0 %v26
  %71 = vmatprep.subr.mxu0 0.0
  %72 = vmatpush1.msra.mxu0 %v27
  %73 = vmatprep.subr.mxu0 0.0
  %74 = vmatpush1.msra.mxu0 0.0
  %75 = vmatprep.subr.mxu0 0.0
  %76 = vmatpush1.msra.mxu0 0.0
  %77 = vmatprep.subr.mxu0 0.0
  %78 = vmatpush1.msra.mxu0 0.0
  %79 = vmatprep.subr.mxu0 0.0
  %80 = vmatpush1.msra.mxu0 0.0
  %81 = vmatprep.subr.mxu0 0.0
  %82 = vmatpush1.msra.mxu0 0.0
  %83 = vmatprep.subr.mxu0 0.0
  %84 = vmatpush1.msra.mxu0 0.0
  %85 = vmatprep.subr.mxu0 0.0
  %86 = vmatpush1.msra.mxu0 0.0
  %87 = vmatprep.subr.mxu0 0.0
  %88 = vmatpush1.msra.mxu0 0.0
  %89 = vmatprep.subr.mxu0 0.0
  %90 = vmatpush1.msra.mxu0 0.0
  %91 = vmatprep.subr.mxu0 0.0
  %92 = vmatpush1.msra.mxu0 0.0
  %93 = vmatprep.subr.mxu0 0.0
  %94 = vmatpush1.msra.mxu0 0.0
  %95 = vmatprep.subr.mxu0 0.0
  %96 = vmatpush1.msra.mxu0 0.0
  %97 = vmatprep.subr.mxu0 0.0
  %98 = vmatpush1.msra.mxu0 0.0
  %99 = vmatprep.subr.mxu0 0.0
  %100 = vmatpush1.msra.mxu0 0.0
  %101 = vmatprep.subr.mxu0 0.0
  %102 = vmatpush1.msra.mxu0 0.0
  %103 = vmatprep.subr.mxu0 0.0
  %104 = vmatpush1.msra.mxu0 0.0
  %105 = vmatprep.subr.mxu0 0.0
  %106 = vmatpush1.msra.mxu0 0.0
  %107 = vmatprep.subr.mxu0 0.0
  %108 = vmatpush1.msra.mxu0 0.0
  %109 = vmatprep.subr.mxu0 0.0
  %110 = vmatpush1.msra.mxu0 0.0
  %111 = vmatprep.subr.mxu0 0.0
  %112 = vmatpush1.msra.mxu0 0.0
  %113 = vmatprep.subr.mxu0 0.0
  %114 = vmatpush1.msra.mxu0 0.0
  %115 = vmatprep.subr.mxu0 0.0
  %116 = vmatpush1.msra.mxu0 0.0
  %117 = vmatprep.subr.mxu0 0.0
  %118 = vmatpush1.msra.mxu0 0.0
  %119 = vmatprep.subr.mxu0 0.0
  %120 = vmatpush1.msra.mxu0 0.0
  %121 = vmatprep.subr.mxu0 0.0
  %122 = vmatpush1.msra.mxu0 0.0
  %123 = vmatprep.subr.mxu0 0.0
  %124 = vmatpush1.msra.mxu0 0.0
  %125 = vmatprep.subr.mxu0 0.0
  %126 = vmatpush1.msra.mxu0 0.0
  %127 = vmatprep.subr.mxu0 0.0
  %128 = vmatpush1.msra.mxu0 0.0
  %129 = vmatprep.subr.mxu0 0.0
  %130 = vmatpush1.msra.mxu0 0.0
  %131 = vmatprep.subr.mxu0 0.0
  %132 = vmatpush1.msra.mxu0 0.0
  %133 = vmatprep.mubr.f32.mxu0 0.0
  %134 = vmatmul.mubr.f32.gmra.mrb[0].mxu0 %v58
  %v135 = vpop.f32.mrb[0].mxu0
  %v136 = vadd.f32 %v39, %v135
  %v137 = vpop.f32.mrb[0].mxu0
  %138 = vmatprep.mubr.f32.mxu0 0.0
  %139 = vmatmul.mubr.f32.gmra.mrb[0].mxu0 %v61
  %v140 = vpop.f32.mrb[0].mxu0
  %v141 = vadd.f32 %v44, %v140
  %v142 = vpop.f32.mrb[0].mxu0
  %143 = vmatprep.mubr.f32.mxu0 0.0
  %144 = vmatmul.mubr.f32.gmra.mrb[0].mxu0 %v64
  %v145 = vpop.f32.mrb[0].mxu0
  %v146 = vadd.f32 %v49, %v145
  %v147 = vpop.f32.mrb[0].mxu0
  %148 = vmatprep.mubr.f32.mxu0 0.0
  %149 = vmatmul.mubr.f32.gmra.mrb[0].mxu0 %v67
  %v150 = vpop.f32.mrb[0].mxu0
  %v151 = vadd.f32 %v54, %v150
  %v152 = vpop.f32.mrb[0].mxu0
  %153 = vdwg.mxu0
  %v154 = vmax.f32 %v136, 0.0
  %v155 = vmax.f32 %v141, 0.0
  %v156 = vmax.f32 %v146, 0.0
  %v157 = vmax.f32 %v151, 0.0
  %v158 = vld [vmem:[%s3] sm:$0xff]
  %v159 = vld [vmem:[%s3 + $0x8] sm:$0xff]
  %v160 = vld [vmem:[%s3 + $0x10] sm:$0xff]
  %v161 = vld [vmem:[%s3 + $0x18] sm:$0xff]
  %v162 = vld [vmem:[%s4] sm:$0xff]
  %v163 = vld [vmem:[%s4 + $0x8] sm:$0xff]
  %v164 = vld [vmem:[%s4 + $0x10] sm:$0xff]
  %v165 = vld [vmem:[%s4 + $0x18] sm:$0xff]
  %167 = vset.pattern.permute.xlu0 0
  %168 = vperm.xlu0 %167, %v162
  %v169 = vpop.permute.xlu0 %168
  %172 = vset.pattern.permute.xlu0 0
  %173 = vperm.xlu0 %172, %v163
  %v174 = vpop.permute.xlu0 %173
  %177 = vset.pattern.permute.xlu0 0
  %178 = vperm.xlu0 %177, %v164
  %v179 = vpop.permute.xlu0 %178
  %182 = vset.pattern.permute.xlu0 0
  %183 = vperm.xlu0 %182, %v165
  %v184 = vpop.permute.xlu0 %183
  %vm186 = vcmask 261120
  %v188 = vsel %vm186, %v158, 0
  %v191 = vsel %vm186, %v159, 0
  %v194 = vsel %vm186, %v160, 0
  %v197 = vsel %vm186, %v161, 0
  %199 = vmatprep.subr.mxu0 0.0
  %200 = vmatpush1.msra.mxu0 %v154
  %201 = vmatprep.subr.mxu0 0.0
  %202 = vmatpush1.msra.mxu0 %v155
  %203 = vmatprep.subr.mxu0 0.0
  %204 = vmatpush1.msra.mxu0 %v156
  %205 = vmatprep.subr.mxu0 0.0
  %206 = vmatpush1.msra.mxu0 %v157
  %207 = vmatprep.subr.mxu0 0.0
  %208 = vmatpush1.msra.mxu0 0.0
  %209 = vmatprep.subr.mxu0 0.0
  %210 = vmatpush1.msra.mxu0 0.0
  %211 = vmatprep.subr.mxu0 0.0
  %212 = vmatpush1.msra.mxu0 0.0
  %213 = vmatprep.subr.mxu0 0.0
  %214 = vmatpush1.msra.mxu0 0.0
  %215 = vmatprep.subr.mxu0 0.0
  %216 = vmatpush1.msra.mxu0 0.0
  %217 = vmatprep.subr.mxu0 0.0
  %218 = vmatpush1.msra.mxu0 0.0
  %219 = vmatprep.subr.mxu0 0.0
  %220 = vmatpush1.msra.mxu0 0.0
  %221 = vmatprep.subr.mxu0 0.0
  %222 = vmatpush1.msra.mxu0 0.0
  %223 = vmatprep.subr.mxu0 0.0
  %224 = vmatpush1.msra.mxu0 0.0
  %225 = vmatprep.subr.mxu0 0.0
  %226 = vmatpush1.msra.mxu0 0.0
  %227 = vmatprep.subr.mxu0 0.0
  %228 = vmatpush1.msra.mxu0 0.0
  %229 = vmatprep.subr.mxu0 0.0
  %230 = vmatpush1.msra.mxu0 0.0
  %231 = vmatprep.subr.mxu0 0.0
  %232 = vmatpush1.msra.mxu0 0.0
  %233 = vmatprep.subr.mxu0 0.0
  %234 = vmatpush1.msra.mxu0 0.0
  %235 = vmatprep.subr.mxu0 0.0
  %236 = vmatpush1.msra.mxu0 0.0
  %237 = vmatprep.subr.mxu0 0.0
  %238 = vmatpush1.msra.mxu0 0.0
  %239 = vmatprep.subr.mxu0 0.0
  %240 = vmatpush1.msra.mxu0 0.0
  %241 = vmatprep.subr.mxu0 0.0
  %242 = vmatpush1.msra.mxu0 0.0
  %243 = vmatprep.subr.mxu0 0.0
  %244 = vmatpush1.msra.mxu0 0.0
  %245 = vmatprep.subr.mxu0 0.0
  %246 = vmatpush1.msra.mxu0 0.0
  %247 = vmatprep.subr.mxu0 0.0
  %248 = vmatpush1.msra.mxu0 0.0
  %249 = vmatprep.subr.mxu0 0.0
  %250 = vmatpush1.msra.mxu0 0.0
  %251 = vmatprep.subr.mxu0 0.0
  %252 = vmatpush1.msra.mxu0 0.0
  %253 = vmatprep.subr.mxu0 0.0
  %254 = vmatpush1.msra.mxu0 0.0
  %255 = vmatprep.subr.mxu0 0.0
  %256 = vmatpush1.msra.mxu0 0.0
  %257 = vmatprep.subr.mxu0 0.0
  %258 = vmatpush1.msra.mxu0 0.0
  %259 = vmatprep.subr.mxu0 0.0
  %260 = vmatpush1.msra.mxu0 0.0
  %261 = vmatprep.subr.mxu0 0.0
  %262 = vmatpush1.msra.mxu0 0.0
  %263 = vmatprep.mubr.f32.mxu0 0.0
  %264 = vmatmul.mubr.f32.gmra.mrb[0].mxu0 %v188
  %v265 = vpop.f32.mrb[0].mxu0
  %v266 = vadd.f32 %v169, %v265
  %v267 = vpop.f32.mrb[0].mxu0
  %268 = vmatprep.mubr.f32.mxu0 0.0
  %269 = vmatmul.mubr.f32.gmra.mrb[0].mxu0 %v191
  %v270 = vpop.f32.mrb[0].mxu0
  %v271 = vadd.f32 %v174, %v270
  %v272 = vpop.f32.mrb[0].mxu0
  %273 = vmatprep.mubr.f32.mxu0 0.0
  %274 = vmatmul.mubr.f32.gmra.mrb[0].mxu0 %v194
  %v275 = vpop.f32.mrb[0].mxu0
  %v276 = vadd.f32 %v179, %v275
  %v277 = vpop.f32.mrb[0].mxu0
  %278 = vmatprep.mubr.f32.mxu0 0.0
  %279 = vmatmul.mubr.f32.gmra.mrb[0].mxu0 %v197
  %v280 = vpop.f32.mrb[0].mxu0
  %v281 = vadd.f32 %v184, %v280
  %v282 = vpop.f32.mrb[0].mxu0
  %283 = vdwg.mxu0
  %v284 = vmax.f32 %v266, 0.0
  %v285 = vmax.f32 %v271, 0.0
  %v286 = vmax.f32 %v276, 0.0
  %v287 = vmax.f32 %v281, 0.0
  %v288 = vld [vmem:[%s5] sm:$0xff]
  %v289 = vld [vmem:[%s6] sm:$0xff]
  %291 = vset.pattern.permute.xlu0 0
  %292 = vperm.xlu0 %291, %v289
  %v293 = vpop.permute.xlu0 %292
  %v296 = vsel %vm186, %v288, 0
  %298 = vmatprep.subr.mxu0 0.0
  %299 = vmatpush1.msra.mxu0 %v284
  %300 = vmatprep.subr.mxu0 0.0
  %301 = vmatpush1.msra.mxu0 %v285
  %302 = vmatprep.subr.mxu0 0.0
  %303 = vmatpush1.msra.mxu0 %v286
  %304 = vmatprep.subr.mxu0 0.0
  %305 = vmatpush1.msra.mxu0 %v287
  %306 = vmatprep.subr.mxu0 0.0
  %307 = vmatpush1.msra.mxu0 0.0
  %308 = vmatprep.subr.mxu0 0.0
  %309 = vmatpush1.msra.mxu0 0.0
  %310 = vmatprep.subr.mxu0 0.0
  %311 = vmatpush1.msra.mxu0 0.0
  %312 = vmatprep.subr.mxu0 0.0
  %313 = vmatpush1.msra.mxu0 0.0
  %314 = vmatprep.subr.mxu0 0.0
  %315 = vmatpush1.msra.mxu0 0.0
  %316 = vmatprep.subr.mxu0 0.0
  %317 = vmatpush1.msra.mxu0 0.0
  %318 = vmatprep.subr.mxu0 0.0
  %319 = vmatpush1.msra.mxu0 0.0
  %320 = vmatprep.subr.mxu0 0.0
  %321 = vmatpush1.msra.mxu0 0.0
  %322 = vmatprep.subr.mxu0 0.0
  %323 = vmatpush1.msra.mxu0 0.0
  %324 = vmatprep.subr.mxu0 0.0
  %325 = vmatpush1.msra.mxu0 0.0
  %326 = vmatprep.subr.mxu0 0.0
  %327 = vmatpush1.msra.mxu0 0.0
  %328 = vmatprep.subr.mxu0 0.0
  %329 = vmatpush1.msra.mxu0 0.0
  %330 = vmatprep.subr.mxu0 0.0
  %331 = vmatpush1.msra.mxu0 0.0
  %332 = vmatprep.subr.mxu0 0.0
  %333 = vmatpush1.msra.mxu0 0.0
  %334 = vmatprep.subr.mxu0 0.0
  %335 = vmatpush1.msra.mxu0 0.0
  %336 = vmatprep.subr.mxu0 0.0
  %337 = vmatpush1.msra.mxu0 0.0
  %338 = vmatprep.subr.mxu0 0.0
  %339 = vmatpush1.msra.mxu0 0.0
  %340 = vmatprep.subr.mxu0 0.0
  %341 = vmatpush1.msra.mxu0 0.0
  %342 = vmatprep.subr.mxu0 0.0
  %343 = vmatpush1.msra.mxu0 0.0
  %344 = vmatprep.subr.mxu0 0.0
  %345 = vmatpush1.msra.mxu0 0.0
  %346 = vmatprep.subr.mxu0 0.0
  %347 = vmatpush1.msra.mxu0 0.0
  %348 = vmatprep.subr.mxu0 0.0
  %349 = vmatpush1.msra.mxu0 0.0
  %350 = vmatprep.subr.mxu0 0.0
  %351 = vmatpush1.msra.mxu0 0.0
  %352 = vmatprep.subr.mxu0 0.0
  %353 = vmatpush1.msra.mxu0 0.0
  %354 = vmatprep.subr.mxu0 0.0
  %355 = vmatpush1.msra.mxu0 0.0
  %356 = vmatprep.subr.mxu0 0.0
  %357 = vmatpush1.msra.mxu0 0.0
  %358 = vmatprep.subr.mxu0 0.0
  %359 = vmatpush1.msra.mxu0 0.0
  %360 = vmatprep.subr.mxu0 0.0
  %361 = vmatpush1.msra.mxu0 0.0
  %362 = vmatprep.mubr.f32.mxu0 0.0
  %363 = vmatmul.mubr.f32.gmra.mrb[0].mxu0 %v296
  %v364 = vpop.f32.mrb[0].mxu0
  %v365 = vadd.f32 %v293, %v364
  %v366 = vpop.f32.mrb[0].mxu0
  %367 = vdwg.mxu0
  %vm368 = vcmask 15360
  %369 = vst.msk [vmem:[%s7] sm:$0xff] %vm368, %v365
  // Predicated region
  $region30: #{tpu_custom_call.1} parent=0 // pred_check
    _
  $region31: #{tpu_custom_call.1} parent=0 // pred_check_branch
    %371 = sbr.rel (0) target = $region33
  $region32: #{tpu_custom_call.1} parent=0 // pred_region
    _
  $region33: #{tpu_custom_call.1} parent=0 // pred_fallthru
    _
  // Predicated region
  $region34: #{tpu_custom_call.1} parent=0 // pred_check
    _
  $region35: #{tpu_custom_call.1} parent=0 // pred_check_branch
    %373 = sbr.rel (0) target = $region37
  $region36: #{tpu_custom_call.1} parent=0 // pred_region
    _
  $region37: #{tpu_custom_call.1} parent=0 // pred_fallthru
    _

</llo_original>
